<compile_context>
chip_gen: v7x
topology: tpu7x:2x2x1
jax: 0.10.0
libtpu: 0.0.40
codegen_flags: <defaults>
</compile_context>

<pallas_src>
import functools

import jax
import jax.numpy as jnp
from jax.experimental import pallas as pl
from jax.experimental.pallas import tpu as pltpu


def _head_transform_kernel(x_ref, w_ref, b_ref, g_ref, beta_ref, o_ref, *,
                           eps, bf16_matmul, gelu_approximate):
    x = x_ref[...]
    if bf16_matmul and x.dtype != jnp.bfloat16:
        # MXU runs native bf16; accumulation stays f32 via preferred_element_type.
        x = x.astype(jnp.bfloat16)

    # Dense: y = x @ W_t + b.  W_t is the weight pre-transposed in the wrapper
    # to [H_in, H_out], so the MXU gets a standard [M,K] @ [K,N] feed and
    # Mosaic never has to relayout/transpose the resident weight per grid step.
    h = jnp.dot(x, w_ref[...], preferred_element_type=jnp.float32)
    h = h + b_ref[...].astype(jnp.float32)

    # GELU.  approximate=True (tanh) runs on the otherwise-idle EUP slot;
    # exact erf GELU is a long VPU polynomial (use gelu_approximate=False only
    # when strict HF/torch ACT2FN["gelu"] parity is required).
    h = jax.nn.gelu(h, approximate=gelu_approximate)

    # LayerNorm over the hidden (last) axis.  Centered (two-pass) variance:
    # subtract the mean before squaring to avoid E[x^2]-mean^2 cancellation,
    # matching torch LayerNorm numerics; the extra VPU pass is cheap next to
    # the matmul.
    inv_h = 1.0 / h.shape[-1]
    mean = jnp.sum(h, axis=-1, keepdims=True) * inv_h
    centered = h - mean
    var = jnp.sum(centered * centered, axis=-1, keepdims=True) * inv_h
    normed = centered * jax.lax.rsqrt(var + eps)
    out = normed * g_ref[...].astype(jnp.float32) + beta_ref[...].astype(jnp.float32)
    o_ref[...] = out.astype(o_ref.dtype)


def _device_kind():
    try:
        return jax.devices()[0].device_kind.lower()
    except Exception:
        return ""


def _pick_row_tile(m, kind):
    # v5e/v6e (128 MiB physical VMEM) comfortably take 1024-row tiles (longer
    # DMAs, amortized per-step overhead); v7x (64 MiB physical / 32 MiB scoped
    # default) stays at 512, which already sits near the DMA roofline.
    # Multiples of 256 fill the 256-wide MXU on v6e/v7x (128 also fine on v5e).
    big_vmem = ("v5" in kind) or ("v6" in kind)
    candidates = (1024, 512, 256, 128) if big_vmem else (512, 256, 128)
    for t in candidates:
        if m >= t:
            return t
    # Tiny problems: a single sublane-aligned block.
    return max(8, ((m + 7) // 8) * 8)


def layoutlmv3_prediction_head_transform(
    hidden_states, dense_w, dense_b, ln_gamma, ln_beta, *,
    eps=1e-5, row_tile=None, bf16_matmul=True, gelu_approximate=True,
    vmem_limit_bytes=None,
):
    """Fused dense + GELU + LayerNorm (LayoutLMv3PredictionHeadTransform).

    hidden_states: [B, S, H] (f32 or bf16 — bf16 in/out halves HBM traffic and
                   is numerically identical for the bf16 matmul path);
    dense_w: [H_out, H_in] (PyTorch nn.Linear layout);
    dense_b / ln_gamma / ln_beta: [H].
    Output dtype matches hidden_states.dtype.
    """
    B, S, H = hidden_states.shape
    M = B * S
    x = hidden_states.reshape(M, H)

    kind = _device_kind()
    if row_tile is None:
        row_tile = _pick_row_tile(M, kind)

    # Pad rows so the grid covers M with whole tiles (padded rows are junk and
    # sliced off afterwards; LayerNorm on them is finite, just wasted work).
    n_blocks = pl.cdiv(M, row_tile)
    M_pad = n_blocks * row_tile
    if M_pad != M:
        x = jnp.pad(x, ((0, M_pad - M), (0, 0)))

    # One-time transpose + cast of the weight outside the kernel:
    # [H_out, H_in] (PyTorch) -> [H_in, H_out] so the in-kernel contraction is
    # a plain [M,K]@[K,N] MXU feed; bf16 halves its HBM read and VMEM footprint.
    w_t = dense_w.T
    if bf16_matmul:
        w_t = w_t.astype(jnp.bfloat16)
    b = dense_b.reshape(1, H)
    gamma = ln_gamma.reshape(1, H)
    beta = ln_beta.reshape(1, H)

    # Only raise the scoped-VMEM limit when the big (v5e/v6e) tile needs it;
    # those chips have 128 MiB physical so 100 MiB scoped is safe there.
    if vmem_limit_bytes is None and row_tile >= 1024:
        vmem_limit_bytes = 100 * 1024 * 1024

    kernel = functools.partial(
        _head_transform_kernel, eps=eps, bf16_matmul=bf16_matmul,
        gelu_approximate=gelu_approximate,
    )

    x_bytes = x.dtype.itemsize
    out_bytes = hidden_states.dtype.itemsize
    cost = pl.CostEstimate(
        flops=2 * M_pad * H * H,
        transcendentals=M_pad * H,                        # tanh (or erf) in GELU
        bytes_accessed=M_pad * H * (x_bytes + out_bytes)  # read x + write out
        + H * H * w_t.dtype.itemsize                      # weight (read once)
        + 3 * H * 4,                                      # bias/gamma/beta
    )

    out = pl.pallas_call(
        kernel,
        out_shape=jax.ShapeDtypeStruct((M_pad, H), hidden_states.dtype),
        grid_spec=pltpu.PrefetchScalarGridSpec(
            num_scalar_prefetch=0,
            grid=(n_blocks,),
            in_specs=[
                # Row tiles: default double-buffered pipelining.
                pl.BlockSpec((row_tile, H), lambda i: (i, 0)),
                # Constant-index blocks: DMA'd once (block index never changes)
                # and held VMEM-resident across the whole row grid.
                pl.BlockSpec((H, H), lambda i: (0, 0)),
                pl.BlockSpec((1, H), lambda i: (0, 0)),
                pl.BlockSpec((1, H), lambda i: (0, 0)),
                pl.BlockSpec((1, H), lambda i: (0, 0)),
            ],
            out_specs=pl.BlockSpec((row_tile, H), lambda i: (i, 0)),
        ),
        compiler_params=pltpu.CompilerParams(
            # Row axis is embarrassingly parallel: shards across the two
            # TensorCores on v7x; harmless elsewhere.
            dimension_semantics=("parallel",),
            vmem_limit_bytes=vmem_limit_bytes,
        ),
        cost_estimate=cost,
    )(x, w_t, b, gamma, beta)

    if M_pad != M:
        out = out[:M]
    return out.reshape(B, S, H)


if __name__ == "__main__":
    # Config: hidden_size=32, hidden_act="gelu", layer_norm_eps=1e-5
    # NOTE: H=32 is a correctness-only toy shape (last dim < 128 means masked
    # stores / <1% MXU util); real LayoutLMv3 is H=768 where the row tiling
    # (256/512/1024 rows, lane-dense H) is what matters for perf.
    B, S, H = 2, 8, 32
    eps = 1e-5

    key = jax.random.PRNGKey(0)
    k_x, k_w, k_b, k_g, k_beta = jax.random.split(key, 5)

    hidden_states = jax.random.normal(k_x, (B, S, H), dtype=jnp.float32)
    dense_w = jax.random.normal(k_w, (H, H), dtype=jnp.float32) * 0.02  # [out, in]
    dense_b = jax.random.normal(k_b, (H,), dtype=jnp.float32) * 0.02
    ln_gamma = jnp.ones((H,), dtype=jnp.float32) + 0.1 * jax.random.normal(k_g, (H,))
    ln_beta = 0.1 * jax.random.normal(k_beta, (H,), dtype=jnp.float32)

    # row_tile=8 forces a multi-step grid (grid=2) even on this tiny shape so
    # the pipelined path is exercised; the default heuristic is used for real
    # shapes.
    out = layoutlmv3_prediction_head_transform(
        hidden_states, dense_w, dense_b, ln_gamma, ln_beta, eps=eps, row_tile=8
    )
    jax.block_until_ready(out)

    # Pure-JAX f32 reference with torch semantics (exact erf GELU, f32 Linear).
    # Kernel defaults deviate deliberately (bf16 matmul with f32 accumulation,
    # tanh GELU), so tolerance is relaxed accordingly.
    def ref(x):
        h = x @ dense_w.T + dense_b
        h = jax.nn.gelu(h, approximate=False)
        mu = jnp.mean(h, -1, keepdims=True)
        var = jnp.mean(jnp.square(h - mu), -1, keepdims=True)
        return (h - mu) * jax.lax.rsqrt(var + eps) * ln_gamma + ln_beta

    expected = ref(hidden_states)
    assert out.shape == expected.shape
    assert out.dtype == hidden_states.dtype
    assert jnp.allclose(out, expected, atol=3e-2, rtol=3e-2), "mismatch vs reference"
    print("KERNEL_OK")
</pallas_src>

<mosaic_0001>
module attributes {stable_mosaic.version = 11 : i64} {
  func.func @_head_transform_kernel(%arg0: i32, %arg1: memref<8x32xf32, #tpu.memory_space<vmem>>, %arg2: memref<32x32xbf16, #tpu.memory_space<vmem>>, %arg3: memref<1x32xf32, #tpu.memory_space<vmem>>, %arg4: memref<1x32xf32, #tpu.memory_space<vmem>>, %arg5: memref<1x32xf32, #tpu.memory_space<vmem>>, %arg6: memref<8x32xf32, #tpu.memory_space<vmem>>) attributes {dimension_semantics = [#tpu.dimension_semantics<parallel>], iteration_bounds = array<i64: 2>, scalar_prefetch = 0 : i64, scratch_operands = 0 : i64, tpu.core_type = #tpu.core_type<tc>, window_params = [{transform_indices = @transform_0, window_bounds = array<i64: 8, 32>}, {pipeline_mode = #tpu.pipeline_mode<synchronous>, transform_indices = @transform_1, window_bounds = array<i64: 32, 32>}, {pipeline_mode = #tpu.pipeline_mode<synchronous>, transform_indices = @transform_2, window_bounds = array<i64: 1, 32>}, {pipeline_mode = #tpu.pipeline_mode<synchronous>, transform_indices = @transform_3, window_bounds = array<i64: 1, 32>}, {pipeline_mode = #tpu.pipeline_mode<synchronous>, transform_indices = @transform_4, window_bounds = array<i64: 1, 32>}, {transform_indices = @transform_5, window_bounds = array<i64: 8, 32>}]} {
    %c0 = arith.constant 0 : index
    %c0_0 = arith.constant 0 : index
    %0 = vector.load %arg1[%c0, %c0_0] : memref<8x32xf32, #tpu.memory_space<vmem>>, vector<8x32xf32>
    %1 = arith.truncf %0 : vector<8x32xf32> to vector<8x32xbf16>
    %c0_1 = arith.constant 0 : index
    %c0_2 = arith.constant 0 : index
    %2 = vector.load %arg2[%c0_1, %c0_2] : memref<32x32xbf16, #tpu.memory_space<vmem>>, vector<32x32xbf16>
    %cst = arith.constant dense<0.000000e+00> : vector<8x32xf32>
    %3 = tpu.matmul %1, %2, %cst {dimension_numbers = #tpu.dot_dimension_numbers<[1], [0], [0], [1], [0, 0, 1, 1], [], []>} : vector<8x32xbf16>, vector<32x32xbf16>, vector<8x32xf32> -> vector<8x32xf32>
    %c0_3 = arith.constant 0 : index
    %c0_4 = arith.constant 0 : index
    %4 = vector.load %arg3[%c0_3, %c0_4] : memref<1x32xf32, #tpu.memory_space<vmem>>, vector<1x32xf32>
    %5 = vector.broadcast %4 : vector<1x32xf32> to vector<8x32xf32>
    %6 = arith.addf %3, %5 : vector<8x32xf32>
    %7 = arith.mulf %6, %6 : vector<8x32xf32>
    %8 = arith.mulf %6, %7 : vector<8x32xf32>
    %cst_5 = arith.constant 4.471500e-02 : f32
    %9 = vector.broadcast %cst_5 : f32 to vector<8x32xf32>
    %10 = arith.mulf %9, %8 : vector<8x32xf32>
    %11 = arith.addf %6, %10 : vector<8x32xf32>
    %cst_6 = arith.constant 0.797884583 : f32
    %12 = vector.broadcast %cst_6 : f32 to vector<8x32xf32>
    %13 = arith.mulf %12, %11 : vector<8x32xf32>
    %14 = math.tanh %13 : vector<8x32xf32>
    %cst_7 = arith.constant 1.000000e+00 : f32
    %15 = vector.broadcast %cst_7 : f32 to vector<8x32xf32>
    %16 = arith.addf %15, %14 : vector<8x32xf32>
    %cst_8 = arith.constant 5.000000e-01 : f32
    %17 = vector.broadcast %cst_8 : f32 to vector<8x32xf32>
    %18 = arith.mulf %17, %16 : vector<8x32xf32>
    %19 = arith.mulf %6, %18 : vector<8x32xf32>
    %cst_9 = arith.constant dense<0.000000e+00> : vector<8xf32>
    %20 = vector.multi_reduction <add>, %19, %cst_9 [1] : vector<8x32xf32> to vector<8xf32>
    %21 = vector.shape_cast %20 : vector<8xf32> to vector<8x1xf32>
    %cst_10 = arith.constant 3.125000e-02 : f32
    %22 = vector.broadcast %cst_10 : f32 to vector<8x1xf32>
    %23 = arith.mulf %21, %22 : vector<8x1xf32>
    %24 = vector.broadcast %23 : vector<8x1xf32> to vector<8x32xf32>
    %25 = arith.subf %19, %24 : vector<8x32xf32>
    %26 = arith.mulf %25, %25 : vector<8x32xf32>
    %cst_11 = arith.constant dense<0.000000e+00> : vector<8xf32>
    %27 = vector.multi_reduction <add>, %26, %cst_11 [1] : vector<8x32xf32> to vector<8xf32>
    %28 = vector.shape_cast %27 : vector<8xf32> to vector<8x1xf32>
    %cst_12 = arith.constant 3.125000e-02 : f32
    %29 = vector.broadcast %cst_12 : f32 to vector<8x1xf32>
    %30 = arith.mulf %28, %29 : vector<8x1xf32>
    %cst_13 = arith.constant 9.99999974E-6 : f32
    %31 = vector.broadcast %cst_13 : f32 to vector<8x1xf32>
    %32 = arith.addf %30, %31 : vector<8x1xf32>
    %33 = math.rsqrt %32 : vector<8x1xf32>
    %34 = vector.broadcast %33 : vector<8x1xf32> to vector<8x32xf32>
    %35 = arith.mulf %25, %34 : vector<8x32xf32>
    %c0_14 = arith.constant 0 : index
    %c0_15 = arith.constant 0 : index
    %36 = vector.load %arg4[%c0_14, %c0_15] : memref<1x32xf32, #tpu.memory_space<vmem>>, vector<1x32xf32>
    %37 = vector.broadcast %36 : vector<1x32xf32> to vector<8x32xf32>
    %38 = arith.mulf %35, %37 : vector<8x32xf32>
    %c0_16 = arith.constant 0 : index
    %c0_17 = arith.constant 0 : index
    %39 = vector.load %arg5[%c0_16, %c0_17] : memref<1x32xf32, #tpu.memory_space<vmem>>, vector<1x32xf32>
    %40 = vector.broadcast %39 : vector<1x32xf32> to vector<8x32xf32>
    %41 = arith.addf %38, %40 : vector<8x32xf32>
    %c0_18 = arith.constant 0 : index
    %c0_19 = arith.constant 0 : index
    %42 = vector.load %arg6[%c0_18, %c0_19] : memref<8x32xf32, #tpu.memory_space<vmem>>, vector<8x32xf32>
    tpu.vector_store %arg6[%c0_18, %c0_19], %41 {strides = array<i32>} : memref<8x32xf32, #tpu.memory_space<vmem>>, vector<8x32xf32>,
    return
  }
  func.func @transform_0(%arg0: i32) -> (i32, i32) {
    %c0_i32 = arith.constant 0 : i32
    %c0_i32_0 = arith.constant 0 : i32
    return %arg0, %c0_i32 : i32, i32
  }
  func.func @transform_1(%arg0: i32) -> (i32, i32) {
    %c0_i32 = arith.constant 0 : i32
    %c0_i32_0 = arith.constant 0 : i32
    %c0_i32_1 = arith.constant 0 : i32
    return %c0_i32, %c0_i32_0 : i32, i32
  }
  func.func @transform_2(%arg0: i32) -> (i32, i32) {
    %c0_i32 = arith.constant 0 : i32
    %c0_i32_0 = arith.constant 0 : i32
    %c0_i32_1 = arith.constant 0 : i32
    return %c0_i32, %c0_i32_0 : i32, i32
  }
  func.func @transform_3(%arg0: i32) -> (i32, i32) {
    %c0_i32 = arith.constant 0 : i32
    %c0_i32_0 = arith.constant 0 : i32
    %c0_i32_1 = arith.constant 0 : i32
    return %c0_i32, %c0_i32_0 : i32, i32
  }
  func.func @transform_4(%arg0: i32) -> (i32, i32) {
    %c0_i32 = arith.constant 0 : i32
    %c0_i32_0 = arith.constant 0 : i32
    %c0_i32_1 = arith.constant 0 : i32
    return %c0_i32, %c0_i32_0 : i32, i32
  }
  func.func @transform_5(%arg0: i32) -> (i32, i32) {
    %c0_i32 = arith.constant 0 : i32
    %c0_i32_0 = arith.constant 0 : i32
    return %arg0, %c0_i32 : i32, i32
  }
}

</mosaic_0001>

<llo_original>
// kernel: tpu_custom_call.1
$region0: #{tpu_custom_call.1}
  #allocation0 [shape = 'u32[]', space=smem, size = 0x4, offset = 0x4, fixed_abs, tag = 'smem constant byte address 0x4 - core index']
  #allocation1 [shape = 'u32[144,128]{1,0:T(1,128)}', space=vmem, size = 0x12000, scoped, tag = 'internal scratch']
  %s0 = inlined_call_operand.hbm [shape: f32[16,32], index: 0, kind: input, shape index: {}]
  %s1 = inlined_call_operand.hbm [shape: bf16[32,32], index: 1, kind: input, shape index: {}]
  %s2 = inlined_call_operand.vmem [shape: f32[1,32], index: 2, kind: input, shape index: {}]
  %s3 = inlined_call_operand.vmem [shape: f32[1,32], index: 3, kind: input, shape index: {}]
  %s4 = inlined_call_operand.vmem [shape: f32[1,32], index: 4, kind: input, shape index: {}]
  %s5 = inlined_call_operand.hbm [shape: f32[16,32], index: 5, kind: output, shape index: {}]
  %s6 = sld [smem:[#allocation0]]
  $region61: #{tpu_custom_call.1} parent=0
    _
  %s8 = ssub.s32 1, %s6
  %s9 = scalar_select 0, %s8, %s6
  $region1: #{tpu_custom_call.1} parent=0
    #allocation2 [shape = 'u8[8192]{0}', space=vmem, size = 0x2000, scoped, tag = 'input window, operand 0']
    #allocation3 [shape = 's32[2]{0}', space=sflag, size = 0x8, scoped, tag = 'scoped memory for tpu_custom_call.1']
    #allocation4 [shape = 's32[2]{0}', space=sflag, size = 0x8, scoped, tag = 'scoped memory for tpu_custom_call.1']
    #allocation5 [shape = 'u8[8192]{0}', space=vmem, size = 0x2000, scoped, tag = 'input window, operand 1, single buffered']
    #allocation6 [shape = 's32[1]{0}', space=sflag, size = 0x4, scoped, tag = 'scoped memory for tpu_custom_call.1']
    #allocation7 [shape = 'u8[8192]{0}', space=vmem, size = 0x2000, scoped, tag = 'output window, operand 0']
    %10 = vsyncpa [#allocation3], 0
    %s11 = scalar_lea.sflag [#allocation3], 1
    %12 = vsyncpa %s11, 0
    %13 = vsyncpa [#allocation6], 0
    %14 = vsyncpa [#allocation4], 0
    %s15 = scalar_lea.sflag [#allocation4], 1
    %16 = vsyncpa %s15, 0
    loop: start=0, step=1, limit=4
    $region2: #{tpu_custom_call.1} parent=1 // loop_pre_header
      _
    $region3: #{tpu_custom_call.1} parent=1 // loop_header
      %s18 = sphi 0, %s22
      %p19 = scmp.ge.s32.totalorder %s18, 4
      %s28 = sphi 0, %s30
      %s31 = sphi 0, %s28
      %s32 = sphi 0, %s31
      %s48 = sphi 0, %s32
      %s52 = sphi 0, %s52
      %s54 = sphi 0, %s52
      %s55 = sphi 0, %s54
      %s69 = sphi 0, %s55
      %s73 = sphi 0, %s73
      %s75 = sphi 0, %s73
      %s76 = sphi 0, %s75
      %s90 = sphi 0, %s76
      %s94 = sphi 0, %s94
      %s96 = sphi 0, %s94
      %s97 = sphi 0, %s96
      %s111 = sphi 0, %s97
      %s115 = sphi 0, %s115
      %s117 = sphi 0, %s115
      %s118 = sphi 0, %s117
      %s132 = sphi 0, %s118
      %s138 = sphi 0, %s140
      %s141 = sphi 0, %s138
      %s142 = sphi 0, %s141
      %s158 = sphi 0, %s142
    $region4: #{tpu_custom_call.1} parent=1 // loop_header_branch
      %21 = sbr.rel (%p19) target = $region8
    $region5: #{tpu_custom_call.1} parent=1 // loop_body
      %s23 = ssub.s32 %s18, 1
      %s24 = ssub.s32 %s18, 2
      %s25 = sadd.s32 %s18, 1
      %s26 = ssub.s32 %s18, %s25
      %p27 = scmp.eq.s32.totalorder %s26, 0
      %s29 = sadd.s32 %s28, 1
      %s30 = scalar_select %p27, %s28, %s29
      %p33 = pneg %p27
      %p34 = scmp.eq.s32.totalorder %s18, 1
      %p35 = por %p33, %p34
      %p36 = scmp.ne.s32.totalorder %s28, %s31
      %p37 = scmp.eq.s32.totalorder %s18, 0
      %p38 = por %p36, %p37
      %p39 = scmp.ne.s32.totalorder %s28, %s31
      %p40 = scmp.eq.s32.totalorder %s23, 1
      %p41 = por %p39, %p40
      %p42 = scmp.ne.s32.totalorder %s31, %s32
      %p43 = scmp.eq.s32.totalorder %s23, 0
      %p44 = por %p42, %p43
      %p45 = scmp.ne.s32.totalorder %s31, %s32
      %p46 = scmp.eq.s32.totalorder %s24, 1
      %p47 = por %p45, %p46
      %p49 = scmp.ne.s32.totalorder %s32, %s48
      %p50 = scmp.eq.s32.totalorder %s24, 0
      %p51 = por %p49, %p50
      %s53 = sadd.s32 %s52, 1
      %p56 = scmp.eq.s32.totalorder %s18, 1
      %p57 = scmp.ne.s32.totalorder %s52, %s54
      %p58 = scmp.eq.s32.totalorder %s18, 0
      %p59 = por %p57, %p58
      %p60 = scmp.ne.s32.totalorder %s52, %s54
      %p61 = scmp.eq.s32.totalorder %s23, 1
      %p62 = por %p60, %p61
      %p63 = scmp.ne.s32.totalorder %s54, %s55
      %p64 = scmp.eq.s32.totalorder %s23, 0
      %p65 = por %p63, %p64
      %p66 = scmp.ne.s32.totalorder %s54, %s55
      %p67 = scmp.eq.s32.totalorder %s24, 1
      %p68 = por %p66, %p67
      %p70 = scmp.ne.s32.totalorder %s55, %s69
      %p71 = scmp.eq.s32.totalorder %s24, 0
      %p72 = por %p70, %p71
      %s74 = sadd.s32 %s73, 1
      %p77 = scmp.eq.s32.totalorder %s18, 1
      %p78 = scmp.ne.s32.totalorder %s73, %s75
      %p79 = scmp.eq.s32.totalorder %s18, 0
      %p80 = por %p78, %p79
      %p81 = scmp.ne.s32.totalorder %s73, %s75
      %p82 = scmp.eq.s32.totalorder %s23, 1
      %p83 = por %p81, %p82
      %p84 = scmp.ne.s32.totalorder %s75, %s76
      %p85 = scmp.eq.s32.totalorder %s23, 0
      %p86 = por %p84, %p85
      %p87 = scmp.ne.s32.totalorder %s75, %s76
      %p88 = scmp.eq.s32.totalorder %s24, 1
      %p89 = por %p87, %p88
      %p91 = scmp.ne.s32.totalorder %s76, %s90
      %p92 = scmp.eq.s32.totalorder %s24, 0
      %p93 = por %p91, %p92
      %s95 = sadd.s32 %s94, 1
      %p98 = scmp.eq.s32.totalorder %s18, 1
      %p99 = scmp.ne.s32.totalorder %s94, %s96
      %p100 = scmp.eq.s32.totalorder %s18, 0
      %p101 = por %p99, %p100
      %p102 = scmp.ne.s32.totalorder %s94, %s96
      %p103 = scmp.eq.s32.totalorder %s23, 1
      %p104 = por %p102, %p103
      %p105 = scmp.ne.s32.totalorder %s96, %s97
      %p106 = scmp.eq.s32.totalorder %s23, 0
      %p107 = por %p105, %p106
      %p108 = scmp.ne.s32.totalorder %s96, %s97
      %p109 = scmp.eq.s32.totalorder %s24, 1
      %p110 = por %p108, %p109
      %p112 = scmp.ne.s32.totalorder %s97, %s111
      %p113 = scmp.eq.s32.totalorder %s24, 0
      %p114 = por %p112, %p113
      %s116 = sadd.s32 %s115, 1
      %p119 = scmp.eq.s32.totalorder %s18, 1
      %p120 = scmp.ne.s32.totalorder %s115, %s117
      %p121 = scmp.eq.s32.totalorder %s18, 0
      %p122 = por %p120, %p121
      %p123 = scmp.ne.s32.totalorder %s115, %s117
      %p124 = scmp.eq.s32.totalorder %s23, 1
      %p125 = por %p123, %p124
      %p126 = scmp.ne.s32.totalorder %s117, %s118
      %p127 = scmp.eq.s32.totalorder %s23, 0
      %p128 = por %p126, %p127
      %p129 = scmp.ne.s32.totalorder %s117, %s118
      %p130 = scmp.eq.s32.totalorder %s24, 1
      %p131 = por %p129, %p130
      %p133 = scmp.ne.s32.totalorder %s118, %s132
      %p134 = scmp.eq.s32.totalorder %s24, 0
      %p135 = por %p133, %p134
      %s136 = ssub.s32 %s18, %s25
      %p137 = scmp.eq.s32.totalorder %s136, 0
      %s139 = sadd.s32 %s138, 1
      %s140 = scalar_select %p137, %s138, %s139
      %p143 = pneg %p137
      %p144 = scmp.eq.s32.totalorder %s18, 1
      %p145 = por %p143, %p144
      %p146 = scmp.ne.s32.totalorder %s138, %s141
      %p147 = scmp.eq.s32.totalorder %s18, 0
      %p148 = por %p146, %p147
      %p149 = scmp.ne.s32.totalorder %s138, %s141
      %p150 = scmp.eq.s32.totalorder %s23, 1
      %p151 = por %p149, %p150
      %p152 = scmp.ne.s32.totalorder %s141, %s142
      %p153 = scmp.eq.s32.totalorder %s23, 0
      %p154 = por %p152, %p153
      %p155 = scmp.ne.s32.totalorder %s141, %s142
      %p156 = scmp.eq.s32.totalorder %s24, 1
      %p157 = por %p155, %p156
      %p159 = scmp.ne.s32.totalorder %s142, %s158
      %p160 = scmp.eq.s32.totalorder %s24, 0
      %p161 = por %p159, %p160
      %p162 = scmp.le.s32.totalorder 1, %s18
      %p163 = scmp.lt.s32.totalorder %s18, 3
      %p164 = pnand %p162, %p163
      %p165 = pneg %p164
      // Predicated region
      $region9: #{tpu_custom_call.1} parent=5 // pred_check
        _
      $region10: #{tpu_custom_call.1} parent=5 // pred_check_branch
        %167 = sbr.rel (%p164) target = $region12
      $region11: #{tpu_custom_call.1} parent=5 // pred_region
        %s168 = ssub.s32 %s18, 1
        // Predicated region
        $region13: #{tpu_custom_call.1} parent=11 // pred_check
          %p169 = pneg %p65
        $region14: #{tpu_custom_call.1} parent=11 // pred_check_branch
          %171 = sbr.rel (%p169) target = $region16
        $region15: #{tpu_custom_call.1} parent=11 // pred_region
          %s173 = ssub.s32 256, 256
          %174 = vsyncadd [#allocation6], %s173
          %s175 = sshll.u32 [#allocation5], 4
          %s176 = int_to_ptr.vmem [resolvable:$true] %s175
          %181 = dma.hbm_to_vmem [thread:$0]  %s1, 256, %s176, [#allocation6], 64, 64, 4
        $region16: #{tpu_custom_call.1} parent=11 // pred_fallthru
          _
        // Predicated region
        $region17: #{tpu_custom_call.1} parent=11 // pred_check
          %p182 = pneg %p86
        $region18: #{tpu_custom_call.1} parent=11 // pred_check_branch
          %184 = sbr.rel (%p182) target = $region20
        $region19: #{tpu_custom_call.1} parent=11 // pred_region
          _
        $region20: #{tpu_custom_call.1} parent=11 // pred_fallthru
          _
        // Predicated region
        $region21: #{tpu_custom_call.1} parent=11 // pred_check
          %p185 = pneg %p107
        $region22: #{tpu_custom_call.1} parent=11 // pred_check_branch
          %187 = sbr.rel (%p185) target = $region24
        $region23: #{tpu_custom_call.1} parent=11 // pred_region
          _
        $region24: #{tpu_custom_call.1} parent=11 // pred_fallthru
          _
        // Predicated region
        $region25: #{tpu_custom_call.1} parent=11 // pred_check
          %p188 = pneg %p128
        $region26: #{tpu_custom_call.1} parent=11 // pred_check_branch
          %190 = sbr.rel (%p188) target = $region28
        $region27: #{tpu_custom_call.1} parent=11 // pred_region
          _
        $region28: #{tpu_custom_call.1} parent=11 // pred_fallthru
          _
      $region12: #{tpu_custom_call.1} parent=5 // pred_fallthru
        _
      %p191 = scmp.lt.s32.totalorder %s18, 2
      // Predicated region
      $region29: #{tpu_custom_call.1} parent=5 // pred_check
        %p192 = pneg %p191
      $region30: #{tpu_custom_call.1} parent=5 // pred_check_branch
        %194 = sbr.rel (%p192) target = $region32
      $region31: #{tpu_custom_call.1} parent=5 // pred_region
        // Predicated region
        $region33: #{tpu_custom_call.1} parent=31 // pred_check
          %p195 = pneg %p38
        $region34: #{tpu_custom_call.1} parent=31 // pred_check_branch
          %197 = sbr.rel (%p195) target = $region36
        $region35: #{tpu_custom_call.1} parent=31 // pred_region
          %s198 = sand.u32 %s28, 1
          %s199 = scalar_lea.sflag [#allocation3], %s198
          %s200 = sand.u32 %s28, 1
          %s201 = smul.addr %s200, 8
          %s202 = scalar_lea.vmem [#allocation2], %s201
          %s204 = ssub.s32 128, 128
          %205 = vsyncadd %s199, %s204
          %s206 = smul.addr %s18, 128
          %s207 = scalar_lea.hbm %s0, %s206
          %s209 = sshll.u32 %s202, 4
          %s210 = int_to_ptr.vmem [resolvable:$true] %s209
          %212 = dma.hbm_to_vmem [thread:$0]  %s207, 128, %s210, %s199
        $region36: #{tpu_custom_call.1} parent=31 // pred_fallthru
          _
      $region32: #{tpu_custom_call.1} parent=5 // pred_fallthru
        _
      %p213 = scmp.le.s32.totalorder 1, %s18
      %p214 = scmp.lt.s32.totalorder %s18, 3
      %p215 = pnand %p213, %p214
      %p216 = pneg %p215
      // Predicated region
      $region37: #{tpu_custom_call.1} parent=5 // pred_check
        _
      $region38: #{tpu_custom_call.1} parent=5 // pred_check_branch
        %218 = sbr.rel (%p215) target = $region40
      $region39: #{tpu_custom_call.1} parent=5 // pred_region
        %s219 = ssub.s32 %s18, 1
        %s220 = sand.u32 %s31, 1
        %s221 = scalar_lea.sflag [#allocation3], %s220
        %s222 = sand.u32 %s31, 1
        %s223 = smul.addr %s222, 8
        %s224 = scalar_lea.vmem [#allocation2], %s223
        // Predicated region
        $region41: #{tpu_custom_call.1} parent=39 // pred_check
          %p225 = pneg %p44
        $region42: #{tpu_custom_call.1} parent=39 // pred_check_branch
          %227 = sbr.rel (%p225) target = $region44
        $region43: #{tpu_custom_call.1} parent=39 // pred_region
          %228 = dma.done %s221, 128
        $region44: #{tpu_custom_call.1} parent=39 // pred_fallthru
          _
        // Predicated region
        $region45: #{tpu_custom_call.1} parent=39 // pred_check
          %p229 = pneg %p65
        $region46: #{tpu_custom_call.1} parent=39 // pred_check_branch
          %231 = sbr.rel (%p229) target = $region48
        $region47: #{tpu_custom_call.1} parent=39 // pred_region
          %232 = dma.done [#allocation6], 256
        $region48: #{tpu_custom_call.1} parent=39 // pred_fallthru
          _
        %s233 = sand.u32 %s31, 1
        %s234 = scalar_lea.sflag [#allocation3], %s233
        %s235 = sand.u32 %s31, 1
        %s236 = smul.addr %s235, 8
        %s237 = scalar_lea.vmem [#allocation2], %s236
        %p238 = pneg %p44
        %p239 = pneg %p41
        %p240 = pneg %p65
        %p241 = pneg %p62
        %p242 = pneg %p86
        %p243 = pneg %p83
        %p244 = pneg %p107
        %p245 = pneg %p104
        %p246 = pneg %p128
        %p247 = pneg %p125
        %p248 = pneg %p154
        %p249 = pneg %p151
        %s250 = sand.u32 %s141, 1
        %s251 = scalar_lea.sflag [#allocation4], %s250
        %s252 = sand.u32 %s141, 1
        %s253 = smul.addr %s252, 8
        %s254 = scalar_lea.vmem [#allocation7], %s253
        %v256 = vld [vmem:[%s224] sm:$0xff]
        %v257 = vpack.c.bf16 %v256, %v256
        %v258 = vld [vmem:[#allocation5] sm:$0xf]
        %v259 = vld [vmem:[#allocation5 + $0x4] sm:$0xf]
        %v260 = vld [vmem:[#allocation5 + $0x8] sm:$0xf]
        %v261 = vld [vmem:[#allocation5 + $0xc] sm:$0xf]
        %v262 = vld [vmem:[%s2] sm:$0x1]
        %v264 = vlaneseq
        %v265 = vshrl.u32 %v264, 7
        %v266 = vsub.s32 0, %v265
        %v267 = vrot.slane %v262, %v266
        %v273 = vunpack.c.l.b16 %v258
        %v274 = vunpack.c.l.b16 %v259
        %v275 = vunpack.c.l.b16 %v260
        %v276 = vunpack.c.l.b16 %v261
        %v277 = vpack.c.b16 %v274, %v273
        %v278 = vpack.c.b16 %v276, %v275
        %vm281 = vcmask 261120
        %v283 = vsel %vm281, %v257, 0
        %285 = vmatprep.subr.bf16.mxu0 0
        %286 = vmatpush1.bf16.msra.mxu0 %v277
        %287 = vmatprep.subr.bf16.mxu0 0
        %288 = vmatpush1.bf16.msra.mxu0 %v278
        %289 = vmatprep.subr.bf16.mxu0 0
        %290 = vmatpush1.bf16.msra.mxu0 0
        %291 = vmatprep.subr.bf16.mxu0 0
        %292 = vmatpush1.bf16.msra.mxu0 0
        %293 = vmatprep.subr.bf16.mxu0 0
        %294 = vmatpush1.bf16.msra.mxu0 0
        %295 = vmatprep.subr.bf16.mxu0 0
        %296 = vmatpush1.bf16.msra.mxu0 0
        %297 = vmatprep.subr.bf16.mxu0 0
        %298 = vmatpush1.bf16.msra.mxu0 0
        %299 = vmatprep.subr.bf16.mxu0 0
        %300 = vmatpush1.bf16.msra.mxu0 0
        %301 = vmatprep.subr.bf16.mxu0 0
        %302 = vmatpush1.bf16.msra.mxu0 0
        %303 = vmatprep.subr.bf16.mxu0 0
        %304 = vmatpush1.bf16.msra.mxu0 0
        %305 = vmatprep.subr.bf16.mxu0 0
        %306 = vmatpush1.bf16.msra.mxu0 0
        %307 = vmatprep.subr.bf16.mxu0 0
        %308 = vmatpush1.bf16.msra.mxu0 0
        %309 = vmatprep.subr.bf16.mxu0 0
        %310 = vmatpush1.bf16.msra.mxu0 0
        %311 = vmatprep.subr.bf16.mxu0 0
        %312 = vmatpush1.bf16.msra.mxu0 0
        %313 = vmatprep.subr.bf16.mxu0 0
        %314 = vmatpush1.bf16.msra.mxu0 0
        %315 = vmatprep.subr.bf16.mxu0 0
        %316 = vmatpush1.bf16.msra.mxu0 0
        %317 = vmatprep.mubr.bf16.mxu0 0
        %318 = vmatmul.mubr.bf16.gmra.mrb[0].mxu0 %v283
        %v319 = vpop.f32.mrb[0].mxu0
        %v320 = vadd.f32 %v267, %v319
        %v321 = vpop.f32.mrb[0].mxu0
        %v322 = vpop.f32.mrb[0].mxu0
        %v323 = vpop.f32.mrb[0].mxu0
        %324 = vdwg.mxu0
        %v325 = vmul.f32 %v320, %v320
        %v326 = vmul.f32 %v320, %v325
        %v327 = vmul.f32 %v326, 0.044715
        %v328 = vadd.f32 %v320, %v327
        %v329 = vmul.f32 %v328, 0.7978846
        %v330 = vtanh.pop %v329
        %v331 = vadd.f32 %v330, 1.0
        %v332 = vmul.f32 %v331, 0.5
        %v333 = vmul.f32 %v320, %v332
        %v334 = vsel %vm281, %v333, 0.0
        %335 = vadd.xlane.f32.xlu0 %v334
        %v336 = vpop.xlane.xlu0 %335
        %v337 = vmul.f32 %v336, 0.03125
        %v338 = vsub.f32 %v333, %v337
        %v339 = vmul.f32 %v338, %v338
        %v340 = vsel %vm281, %v339, 0.0
        %341 = vadd.xlane.f32.xlu0 %v340
        %v342 = vpop.xlane.xlu0 %341
        %v343 = vmul.f32 %v342, 0.03125
        %v344 = vadd.f32 %v343, 1e-05
        %v345 = vrsqrt.pop %v344
        %v346 = vmul.f32 %v338, %v345
        %v347 = vld [vmem:[%s3] sm:$0x1]
        %v349 = vlaneseq
        %v350 = vshrl.u32 %v349, 7
        %v351 = vsub.s32 0, %v350
        %v352 = vrot.slane %v347, %v351
        %v354 = vmul.f32 %v346, %v352
        %v355 = vld [vmem:[%s4] sm:$0x1]
        %v357 = vlaneseq
        %v358 = vshrl.u32 %v357, 7
        %v359 = vsub.s32 0, %v358
        %v360 = vrot.slane %v355, %v359
        %v362 = vadd.f32 %v354, %v360
        %363 = vst.msk [vmem:[%s254] sm:$0xff] %vm281, %v362
        %s364 = sand.u32 %s141, 1
        %s365 = scalar_lea.sflag [#allocation4], %s364
        %s366 = sand.u32 %s141, 1
        %s367 = smul.addr %s366, 8
        %s368 = scalar_lea.vmem [#allocation7], %s367
        // Predicated region
        $region49: #{tpu_custom_call.1} parent=39 // pred_check
          %p369 = pneg %p151
        $region50: #{tpu_custom_call.1} parent=39 // pred_check_branch
          %371 = sbr.rel (%p369) target = $region52
        $region51: #{tpu_custom_call.1} parent=39 // pred_region
          %s373 = ssub.s32 128, 128
          %374 = vsyncadd %s365, %s373
          %s375 = smul.addr %s23, 128
          %s376 = scalar_lea.hbm %s5, %s375
          %s378 = sshll.u32 %s368, 4
          %s379 = int_to_ptr.vmem [resolvable:$true] %s378
          %381 = dma.vmem_to_hbm [thread:$0]  %s379, 128, %s376, %s365
        $region52: #{tpu_custom_call.1} parent=39 // pred_fallthru
          _
      $region40: #{tpu_custom_call.1} parent=5 // pred_fallthru
        _
      %p382 = scmp.le.s32.totalorder 2, %s18
      // Predicated region
      $region53: #{tpu_custom_call.1} parent=5 // pred_check
        %p383 = pneg %p382
      $region54: #{tpu_custom_call.1} parent=5 // pred_check_branch
        %385 = sbr.rel (%p383) target = $region56
      $region55: #{tpu_custom_call.1} parent=5 // pred_region
        %s386 = ssub.s32 %s18, 2
        // Predicated region
        $region57: #{tpu_custom_call.1} parent=55 // pred_check
          %p387 = pneg %p157
        $region58: #{tpu_custom_call.1} parent=55 // pred_check_branch
          %389 = sbr.rel (%p387) target = $region60
        $region59: #{tpu_custom_call.1} parent=55 // pred_region
          %s390 = sand.u32 %s142, 1
          %s391 = scalar_lea.sflag [#allocation4], %s390
          %s392 = sand.u32 %s142, 1
          %s393 = smul.addr %s392, 8
          %s394 = scalar_lea.vmem [#allocation7], %s393
          %395 = dma.done %s391, 128
        $region60: #{tpu_custom_call.1} parent=55 // pred_fallthru
          _
      $region56: #{tpu_custom_call.1} parent=5 // pred_fallthru
        _
    $region6: #{tpu_custom_call.1} parent=1 // loop_footer
      %s22 = sadd.s32 1, %s18
    $region7: #{tpu_custom_call.1} parent=1 // loop_footer_branch
      %17 = sbr.rel target = $region3
    $region8: #{tpu_custom_call.1} parent=1 // loop_exit
      _
    %396 = vsyncpa [#allocation3], 1
    %s397 = scalar_lea.sflag [#allocation3], 1
    %398 = vsyncpa %s397, 1
    %399 = vsyncpa [#allocation6], 1
    %400 = vsyncpa [#allocation4], 1
    %s401 = scalar_lea.sflag [#allocation4], 1
    %402 = vsyncpa %s401, 1

</llo_original>
